<compile_context>
chip_gen: v5e
topology: v5e:2x2
jax: 0.10.0
libtpu: 0.0.40
codegen_flags: <defaults>
</compile_context>

<pallas_src>
import functools
import math

import jax
import jax.numpy as jnp
from jax.experimental import pallas as pl
from jax.experimental.pallas import tpu as pltpu


_NEG_FILL = -1e30  # finite "minus infinity": keeps fully-masked / padded rows NaN-free


# ---------------------------------------------------------------------------
# Pallas kernel: scaled dot-product attention core (eval mode).
# ---------------------------------------------------------------------------
def _sdpa_kernel(*refs, inv_scale, have_mask, return_attn, lk_valid):
    """One grid step processes `block_b` batch elements with full (padded) tiles."""
    i = 0
    q_ref = refs[i]; i += 1            # (Bt, Lq_p, Dk_p)  caller dtype
    k_ref = refs[i]; i += 1            # (Bt, Lk_p, Dk_p)
    v_ref = refs[i]; i += 1            # (Bt, Lk_p, Dv_p)
    mask_ref = None
    if have_mask:
        mask_ref = refs[i]; i += 1     # (Bt, Lq_p, Lk_p)  int8, nonzero == masked
    out_ref = refs[i]; i += 1          # (Bt, Lq_p, Dv_p)
    attn_ref = refs[i] if return_attn else None

    q = q_ref[...]
    k = k_ref[...]
    v = v_ref[...]

    # scores = q @ k^T / sqrt(d_k): contract the last dim of both operands
    # (no explicit transpose), f32 MXU accumulation, inputs in native dtype.
    scores = jnp.einsum("bqd,bkd->bqk", q, k,
                        preferred_element_type=jnp.float32) * inv_scale

    if have_mask:
        mask = mask_ref[...].astype(jnp.float32)
        scores = jnp.where(mask != 0.0, _NEG_FILL, scores)
    elif lk_valid < scores.shape[-1]:
        # No user mask, but Lk was padded to a lane multiple: mask the pad keys.
        col = jax.lax.broadcasted_iota(jnp.int32, scores.shape, 2)
        scores = jnp.where(col < lk_valid, scores, _NEG_FILL)

    # Numerically stable softmax; the reciprocal runs on the EUP slot.
    m = jnp.max(scores, axis=-1, keepdims=True)
    e = jnp.exp(scores - m)
    denom = jnp.sum(e, axis=-1, keepdims=True)
    attn = e * pl.reciprocal(denom, approx=True)

    # TODO(synk): training-mode dropout on `attn` is not modeled (eval mode).

    if return_attn:
        attn_ref[...] = attn.astype(attn_ref.dtype)

    out = jnp.einsum("bqk,bkd->bqd", attn.astype(v.dtype), v,
                     preferred_element_type=jnp.float32)
    out_ref[...] = out.astype(out_ref.dtype)


def _round_up(x, m):
    return ((x + m - 1) // m) * m


def _pad_dim(x, axis, target, value=0):
    pad = target - x.shape[axis]
    if pad == 0:
        return x
    widths = [(0, 0)] * x.ndim
    widths[axis] = (0, pad)
    return jnp.pad(x, widths, constant_values=value)


def scaled_dot_product_attention(q, k, v, attn_mask=None, *, return_attn=True,
                                 block_b=None,
                                 vmem_limit_bytes=40 * 1024 * 1024,
                                 interpret=False):
    """Pallas ScaledDotProductAttention.forward (eval mode).

    q: (B, Lq, Dk), k: (B, Lk, Dk), v: (B, Lk, Dv); attn_mask optional
    (B, Lq, Lk), nonzero/True == masked.  Returns (outputs, attn) when
    `return_attn`, else just outputs (the module discards attn anyway).
    """
    B, Lq, Dk = q.shape
    Bk, Lk, Dkk = k.shape
    Bv, Lkv, Dv = v.shape
    assert (Bk, Dkk) == (B, Dk) and (Bv, Lkv) == (B, Lk)
    inv_scale = 1.0 / math.sqrt(float(Dk))  # scale uses the *original* d_k

    # Lane/sublane friendly padding: 128-lane last dims (unmasked vst + aligned
    # MXU tiles), 8-sublane query rows.  Results are sliced back below.
    lq_p = _round_up(Lq, 8)
    lk_p = _round_up(Lk, 128)
    dk_p = _round_up(Dk, 128)
    dv_p = _round_up(Dv, 128)

    q_p = _pad_dim(_pad_dim(q, 1, lq_p), 2, dk_p)
    k_p = _pad_dim(_pad_dim(k, 1, lk_p), 2, dk_p)
    v_p = _pad_dim(_pad_dim(v, 1, lk_p), 2, dv_p)

    have_mask = attn_mask is not None
    inputs = [q_p, k_p, v_p]
    if have_mask:
        assert attn_mask.shape == (B, Lq, Lk)
        m8 = attn_mask.astype(jnp.int8)
        m8 = _pad_dim(_pad_dim(m8, 1, lq_p, value=1), 2, lk_p, value=1)
        inputs.append(m8)

    # Per-batch-element VMEM footprint (double-buffered I/O + f32 intermediates).
    ib = q.dtype.itemsize
    per_elem = 2 * (lq_p * dk_p + lk_p * dk_p + lk_p * dv_p) * ib
    per_elem += 2 * lq_p * dv_p * ib
    if have_mask:
        per_elem += 2 * lq_p * lk_p              # int8 mask
    if return_attn:
        per_elem += 2 * lq_p * lk_p * ib
    per_elem += (2 * lq_p * lk_p + lq_p * dv_p) * 4

    if block_b is None:
        budget = 24 * 1024 * 1024                # conservative for v7x (64 MiB VMEM)
        block_b = 1
        for bt in range(1, B + 1):
            if B % bt:
                continue
            if B >= 2 and B // bt < 2:           # keep >= 2 grid steps (v7x megacore)
                continue
            if bt * per_elem > budget:
                continue
            block_b = bt
    assert B % block_b == 0
    grid = (B // block_b,)

    kernel = functools.partial(_sdpa_kernel, inv_scale=inv_scale,
                               have_mask=have_mask, return_attn=return_attn,
                               lk_valid=Lk)

    in_specs = [
        pl.BlockSpec((block_b, lq_p, dk_p), lambda b: (b, 0, 0)),
        pl.BlockSpec((block_b, lk_p, dk_p), lambda b: (b, 0, 0)),
        pl.BlockSpec((block_b, lk_p, dv_p), lambda b: (b, 0, 0)),
    ]
    if have_mask:
        in_specs.append(pl.BlockSpec((block_b, lq_p, lk_p), lambda b: (b, 0, 0)))

    out_spec_o = pl.BlockSpec((block_b, lq_p, dv_p), lambda b: (b, 0, 0))
    if return_attn:
        out_shape = (jax.ShapeDtypeStruct((B, lq_p, dv_p), q.dtype),
                     jax.ShapeDtypeStruct((B, lq_p, lk_p), q.dtype))
        out_specs = (out_spec_o,
                     pl.BlockSpec((block_b, lq_p, lk_p), lambda b: (b, 0, 0)))
    else:
        out_shape = jax.ShapeDtypeStruct((B, lq_p, dv_p), q.dtype)
        out_specs = out_spec_o

    grid_spec = pltpu.PrefetchScalarGridSpec(
        num_scalar_prefetch=0,
        grid=grid,
        in_specs=in_specs,
        out_specs=out_specs,
    )

    res = pl.pallas_call(
        kernel,
        out_shape=out_shape,
        grid_spec=grid_spec,
        compiler_params=pltpu.CompilerParams(
            dimension_semantics=("parallel",),
            vmem_limit_bytes=vmem_limit_bytes),
        interpret=interpret,
    )(*inputs)

    if return_attn:
        out_p, attn_p = res
        return out_p[:, :Lq, :Dv], attn_p[:, :Lq, :Lk]
    return res[:, :Lq, :Dv]


# ---------------------------------------------------------------------------
# Pure-JAX reference for the attention core.
# ---------------------------------------------------------------------------
def _attention_reference(q, k, v, attn_mask=None):
    dk = q.shape[-1]
    scores = jnp.einsum("bqd,bkd->bqk", q.astype(jnp.float32),
                        k.astype(jnp.float32)) / math.sqrt(float(dk))
    if attn_mask is not None:
        scores = jnp.where(attn_mask, -jnp.inf, scores)
    attn = jax.nn.softmax(scores, axis=-1)
    out = jnp.einsum("bqk,bkd->bqd", attn, v.astype(jnp.float32))
    return out.astype(q.dtype), attn.astype(q.dtype)


# ---------------------------------------------------------------------------
# Full LMRBiLSTMAttnCRF2 forward (eval mode) built around the Pallas kernel.
# The glue tensors are (batch x 64)-sized, far below one vreg tile, so they are
# executed by XLA around the kernel.
# TODO(synk): the tiny per-head projections / LayerNorm / LinearModel glue is
#             left in plain JAX (no benefit from a Pallas kernel at these sizes).
# ---------------------------------------------------------------------------
def init_lmr_params(key, *, d_model, d_k, d_v, n_heads, hidden_dim, num_output,
                    dtype=jnp.float32):
    keys = jax.random.split(key, 5)

    def _init(k, shape, fan_in, fan_out):
        std = math.sqrt(2.0 / (fan_in + fan_out))
        return (jax.random.normal(k, shape, jnp.float32) * std).astype(dtype)

    params = {
        "w_q": _init(keys[0], (n_heads, d_model, d_k), d_model, d_k),
        "w_k": _init(keys[1], (n_heads, d_model, d_k), d_model, d_k),
        "w_v": _init(keys[2], (n_heads, d_model, d_v), d_model, d_v),
        "proj_w": _init(keys[3], (n_heads * d_v, d_model), n_heads * d_v, d_model),
        "proj_b": jnp.zeros((d_model,), dtype),
        "ln_gamma": jnp.ones((d_model,), dtype),
        "ln_beta": jnp.zeros((d_model,), dtype),
        "ln_eps": 1e-3,
    }

    # LinearModel chain: divide the width by 16 until it is <= output_size.
    fcn = []
    in_size = hidden_dim * num_output
    temp = in_size // 16
    kk = keys[4]
    while True:
        kk, sub = jax.random.split(kk)
        if temp <= num_output:
            fcn.append((_init(sub, (in_size, num_output), in_size, num_output),
                        jnp.zeros((num_output,), dtype)))
            break
        fcn.append((_init(sub, (in_size, temp), in_size, temp),
                    jnp.zeros((temp,), dtype)))
        in_size = temp
        temp = temp // 16
    params["fcn"] = fcn
    return params


def lmr_bilstm_attn_crf2_forward(params, batch, z=None):
    """Eval-mode forward of LMRBiLSTMAttnCRF2; `z` is unused (as in PyTorch)."""
    del z
    b, r, c = batch.shape
    n_heads, d_model, d_k = params["w_q"].shape
    d_v = params["w_v"].shape[-1]
    assert r * c == d_model, "module requires reshape(batch) rows == embedding_size"

    x = batch.reshape(b, r * c)                                      # (b, d_model)
    residual = x

    # q.repeat(h,1,1).view(h,-1,d_model) @ w  ==  einsum over heads.
    q_s = jnp.einsum("bm,hmk->hbk", x, params["w_q"]).reshape(n_heads * b, 1, d_k)
    k_s = jnp.einsum("bm,hmk->hbk", x, params["w_k"]).reshape(n_heads * b, 1, d_k)
    v_s = jnp.einsum("bm,hmv->hbv", x, params["w_v"]).reshape(n_heads * b, 1, d_v)

    # Pallas attention core (attn weights are discarded by the module -> fast path).
    attn_out = scaled_dot_product_attention(q_s, k_s, v_s, attn_mask=None,
                                            return_attn=False)

    # torch.split(outputs, b, dim=0) + cat(dim=-1): (h*b,1,dv) -> (b,1,h*dv).
    heads = attn_out.reshape(n_heads, b, 1, d_v)
    cat = jnp.transpose(heads, (1, 2, 0, 3)).reshape(b, 1, n_heads * d_v)

    proj = cat @ params["proj_w"] + params["proj_b"]                 # (b, 1, d_model)

    # residual (b, d_model) + proj (b, 1, d_model) broadcasts to (b, b, d_model),
    # exactly as the PyTorch module does.
    summed = residual[None, :, :] + proj

    # LayerNormalization: unbiased std along the last dim, eps added to std.
    mean = jnp.mean(summed, axis=-1, keepdims=True)
    std = jnp.std(summed, axis=-1, keepdims=True, ddof=1)
    ln = (summed - mean) / (std + params["ln_eps"])
    ln = params["ln_gamma"] * ln + params["ln_beta"]                 # (b, b, d_model)

    out = ln.reshape(ln.shape[0], -1)                                # (b, b*d_model)
    for w, bias in params["fcn"]:
        out = out @ w + bias
    return out


if __name__ == "__main__":
    root = jax.random.PRNGKey(0)
    k_attn, k_mod = jax.random.split(root)

    # ----- 1) Attention core vs. pure-JAX reference (per-head style shapes) -----
    B, Lq, Lk, Dk, Dv = 8, 16, 16, 32, 32
    kq, kk, kv = jax.random.split(k_attn, 3)
    q = jax.random.normal(kq, (B, Lq, Dk), jnp.float32)
    k = jax.random.normal(kk, (B, Lk, Dk), jnp.float32)
    v = jax.random.normal(kv, (B, Lk, Dv), jnp.float32)

    out, attn = scaled_dot_product_attention(q, k, v, attn_mask=None)
    jax.block_until_ready((out, attn))
    out_r, attn_r = _attention_reference(q, k, v, None)
    assert jnp.allclose(out, out_r, atol=2e-3, rtol=2e-3)
    assert jnp.allclose(attn, attn_r, atol=2e-3, rtol=2e-3)

    # Outputs-only fast path (the module discards the attention weights).
    out_only = scaled_dot_product_attention(q, k, v, return_attn=False)
    jax.block_until_ready(out_only)
    assert jnp.allclose(out_only, out_r, atol=2e-3, rtol=2e-3)

    # Masked path (mask passed as bool, converted to int8 internally).
    mask = jnp.zeros((B, Lq, Lk), dtype=bool).at[:, :, -3:].set(True)
    out_m, attn_m = scaled_dot_product_attention(q, k, v, attn_mask=mask)
    jax.block_until_ready((out_m, attn_m))
    out_mr, attn_mr = _attention_reference(q, k, v, mask)
    assert jnp.allclose(out_m, out_mr, atol=2e-3, rtol=2e-3)
    assert jnp.allclose(attn_m, attn_mr, atol=2e-3, rtol=2e-3)

    # ----- 2) Full LMRBiLSTMAttnCRF2 forward around the kernel -----
    b, r, c = 2, 8, 8                       # embedding_size = r*c = 64
    d_model = r * c
    d_k = d_v = 32
    n_heads = 3
    hidden_dim, num_output = 2, 64          # LinearModel input = hidden_dim*num_output = b*d_model
    kp, kb, kz = jax.random.split(k_mod, 3)
    params = init_lmr_params(kp, d_model=d_model, d_k=d_k, d_v=d_v,
                             n_heads=n_heads, hidden_dim=hidden_dim,
                             num_output=num_output)
    batch = jax.random.normal(kb, (b, r, c), jnp.float32)
    z = jax.random.normal(kz, (b, 32), jnp.float32)   # unused by forward (signature parity)
    y = lmr_bilstm_attn_crf2_forward(params, batch, z)
    jax.block_until_ready(y)
    assert y.shape == (b, num_output)
    assert bool(jnp.all(jnp.isfinite(y)))

    print("KERNEL_OK")
</pallas_src>

<mosaic_0001>
module attributes {stable_mosaic.version = 11 : i64} {
  func.func @_sdpa_kernel(%arg0: i32, %arg1: memref<4x16x128xf32, #tpu.memory_space<vmem>>, %arg2: memref<4x128x128xf32, #tpu.memory_space<vmem>>, %arg3: memref<4x128x128xf32, #tpu.memory_space<vmem>>, %arg4: memref<4x16x128xf32, #tpu.memory_space<vmem>>, %arg5: memref<4x16x128xf32, #tpu.memory_space<vmem>>) attributes {dimension_semantics = [#tpu.dimension_semantics<parallel>], iteration_bounds = array<i64: 2>, scalar_prefetch = 0 : i64, scratch_operands = 0 : i64, tpu.core_type = #tpu.core_type<tc>, window_params = [{transform_indices = @transform_0, window_bounds = array<i64: 4, 16, 128>}, {transform_indices = @transform_1, window_bounds = array<i64: 4, 128, 128>}, {transform_indices = @transform_2, window_bounds = array<i64: 4, 128, 128>}, {transform_indices = @transform_3, window_bounds = array<i64: 4, 16, 128>}, {transform_indices = @transform_4, window_bounds = array<i64: 4, 16, 128>}]} {
    %c0 = arith.constant 0 : index
    %c0_0 = arith.constant 0 : index
    %c0_1 = arith.constant 0 : index
    %0 = vector.load %arg1[%c0, %c0_0, %c0_1] : memref<4x16x128xf32, #tpu.memory_space<vmem>>, vector<4x16x128xf32>
    %c0_2 = arith.constant 0 : index
    %c0_3 = arith.constant 0 : index
    %c0_4 = arith.constant 0 : index
    %1 = vector.load %arg2[%c0_2, %c0_3, %c0_4] : memref<4x128x128xf32, #tpu.memory_space<vmem>>, vector<4x128x128xf32>
    %c0_5 = arith.constant 0 : index
    %c0_6 = arith.constant 0 : index
    %c0_7 = arith.constant 0 : index
    %2 = vector.load %arg3[%c0_5, %c0_6, %c0_7] : memref<4x128x128xf32, #tpu.memory_space<vmem>>, vector<4x128x128xf32>
    "tpu.trace_start"() <{level = 10 : i32, message = "bqd,bkd->bqk"}> : () -> ()
    %cst = arith.constant dense<0.000000e+00> : vector<4x16x128xf32>
    %3 = tpu.matmul %0, %1, %cst {dimension_numbers = #tpu.dot_dimension_numbers<[2], [2], [1], [1], [0, 0, 0, 1, 1, 1], [0], [0]>} : vector<4x16x128xf32>, vector<4x128x128xf32>, vector<4x16x128xf32> -> vector<4x16x128xf32>
    "tpu.trace_stop"() : () -> ()
    %cst_8 = arith.constant 0.176776692 : f32
    %4 = vector.broadcast %cst_8 : f32 to vector<4x16x128xf32>
    %5 = arith.mulf %3, %4 : vector<4x16x128xf32>
    %6 = tpu.iota {dimensions = array<i32: 2>} : vector<4x16x128xi32>
    %c16_i32 = arith.constant 16 : i32
    %7 = vector.broadcast %c16_i32 : i32 to vector<4x16x128xi32>
    %8 = arith.cmpi slt, %6, %7 : vector<4x16x128xi32>
    %cst_9 = arith.constant -1.000000e+30 : f32
    %9 = vector.broadcast %cst_9 : f32 to vector<4x16x128xf32>
    %10 = arith.select %8, %5, %9 : vector<4x16x128xi1>, vector<4x16x128xf32>
    %cst_10 = arith.constant dense<0xFF800000> : vector<4x16xf32>
    %11 = vector.multi_reduction <maximumf>, %10, %cst_10 [2] : vector<4x16x128xf32> to vector<4x16xf32>
    %12 = vector.shape_cast %11 : vector<4x16xf32> to vector<4x16x1xf32>
    %13 = vector.broadcast %12 : vector<4x16x1xf32> to vector<4x16x128xf32>
    %14 = arith.subf %10, %13 : vector<4x16x128xf32>
    %15 = math.exp %14 : vector<4x16x128xf32>
    %cst_11 = arith.constant dense<0.000000e+00> : vector<4x16xf32>
    %16 = vector.multi_reduction <add>, %15, %cst_11 [2] : vector<4x16x128xf32> to vector<4x16xf32>
    %17 = vector.shape_cast %16 : vector<4x16xf32> to vector<4x16x1xf32>
    %18 = tpu.reciprocal %17 {approx = true} : vector<4x16x1xf32> -> vector<4x16x1xf32>
    %19 = vector.broadcast %18 : vector<4x16x1xf32> to vector<4x16x128xf32>
    %20 = arith.mulf %15, %19 : vector<4x16x128xf32>
    %c0_12 = arith.constant 0 : index
    %c0_13 = arith.constant 0 : index
    %c0_14 = arith.constant 0 : index
    %21 = vector.load %arg5[%c0_12, %c0_13, %c0_14] : memref<4x16x128xf32, #tpu.memory_space<vmem>>, vector<4x16x128xf32>
    tpu.vector_store %arg5[%c0_12, %c0_13, %c0_14], %20 {strides = array<i32>} : memref<4x16x128xf32, #tpu.memory_space<vmem>>, vector<4x16x128xf32>,
    "tpu.trace_start"() <{level = 10 : i32, message = "bqk,bkd->bqd"}> : () -> ()
    %cst_15 = arith.constant dense<0.000000e+00> : vector<4x16x128xf32>
    %22 = tpu.matmul %20, %2, %cst_15 {dimension_numbers = #tpu.dot_dimension_numbers<[2], [1], [1], [2], [0, 0, 0, 1, 1, 2], [0], [0]>} : vector<4x16x128xf32>, vector<4x128x128xf32>, vector<4x16x128xf32> -> vector<4x16x128xf32>
    "tpu.trace_stop"() : () -> ()
    %c0_16 = arith.constant 0 : index
    %c0_17 = arith.constant 0 : index
    %c0_18 = arith.constant 0 : index
    %23 = vector.load %arg4[%c0_16, %c0_17, %c0_18] : memref<4x16x128xf32, #tpu.memory_space<vmem>>, vector<4x16x128xf32>
    tpu.vector_store %arg4[%c0_16, %c0_17, %c0_18], %22 {strides = array<i32>} : memref<4x16x128xf32, #tpu.memory_space<vmem>>, vector<4x16x128xf32>,
    return
  }
  func.func @transform_0(%arg0: i32) -> (i32, i32, i32) {
    %c0_i32 = arith.constant 0 : i32
    %c0_i32_0 = arith.constant 0 : i32
    %c0_i32_1 = arith.constant 0 : i32
    return %arg0, %c0_i32, %c0_i32_0 : i32, i32, i32
  }
  func.func @transform_1(%arg0: i32) -> (i32, i32, i32) {
    %c0_i32 = arith.constant 0 : i32
    %c0_i32_0 = arith.constant 0 : i32
    %c0_i32_1 = arith.constant 0 : i32
    return %arg0, %c0_i32, %c0_i32_0 : i32, i32, i32
  }
  func.func @transform_2(%arg0: i32) -> (i32, i32, i32) {
    %c0_i32 = arith.constant 0 : i32
    %c0_i32_0 = arith.constant 0 : i32
    %c0_i32_1 = arith.constant 0 : i32
    return %arg0, %c0_i32, %c0_i32_0 : i32, i32, i32
  }
  func.func @transform_3(%arg0: i32) -> (i32, i32, i32) {
    %c0_i32 = arith.constant 0 : i32
    %c0_i32_0 = arith.constant 0 : i32
    %c0_i32_1 = arith.constant 0 : i32
    return %arg0, %c0_i32, %c0_i32_0 : i32, i32, i32
  }
  func.func @transform_4(%arg0: i32) -> (i32, i32, i32) {
    %c0_i32 = arith.constant 0 : i32
    %c0_i32_0 = arith.constant 0 : i32
    %c0_i32_1 = arith.constant 0 : i32
    return %arg0, %c0_i32, %c0_i32_0 : i32, i32, i32
  }
}

</mosaic_0001>

<llo_original>
// kernel: tpu_custom_call.1
$region0: #{tpu_custom_call.1}
  #allocation0 [shape = 'u32[]', space=smem, size = 0x4, offset = 0x4, fixed_abs, tag = 'smem constant byte address 0x4 - core index']
  #allocation1 [shape = 'u32[72,128]{1,0:T(1,128)}', space=vmem, size = 0x9000, scoped, tag = 'internal scratch']
  %s0 = inlined_call_operand.hbm [shape: f32[8,16,128], index: 0, kind: input, shape index: {}]
  %s1 = inlined_call_operand.hbm [shape: f32[8,128,128], index: 1, kind: input, shape index: {}]
  %s2 = inlined_call_operand.hbm [shape: f32[8,128,128], index: 2, kind: input, shape index: {}]
  %s3 = inlined_call_operand.hbm [shape: f32[8,16,128], index: 3, kind: output, shape index: {0}]
  %s4 = inlined_call_operand.hbm [shape: f32[8,16,128], index: 4, kind: output, shape index: {1}]
  %5 = xla_tuple %s3, %s4
  %s6 = sld [smem:[#allocation0]]
  $region65: #{tpu_custom_call.1} parent=0
    _
  %s8 = ssub.s32 1, %s6
  %s9 = scalar_select 0, %s8, %s6
  $region1: #{tpu_custom_call.1} parent=0
    #allocation2 [shape = 'u8[65536]{0}', space=vmem, size = 0x10000, scoped, tag = 'input window, operand 0']
    #allocation3 [shape = 's32[2]{0}', space=sflag, size = 0x8, scoped, tag = 'scoped memory for tpu_custom_call.1']
    #allocation4 [shape = 's32[2]{0}', space=sflag, size = 0x8, scoped, tag = 'scoped memory for tpu_custom_call.1']
    #allocation5 [shape = 'u8[524288]{0}', space=vmem, size = 0x80000, scoped, tag = 'input window, operand 1']
    #allocation6 [shape = 's32[2]{0}', space=sflag, size = 0x8, scoped, tag = 'scoped memory for tpu_custom_call.1']
    #allocation7 [shape = 'u8[524288]{0}', space=vmem, size = 0x80000, scoped, tag = 'input window, operand 2']
    #allocation8 [shape = 'u8[65536]{0}', space=vmem, size = 0x10000, scoped, tag = 'output window, operand 0']
    #allocation9 [shape = 'u8[65536]{0}', space=vmem, size = 0x10000, scoped, tag = 'output window, operand 1']
    #allocation10 [shape = 's32[2]{0}', space=sflag, size = 0x8, scoped, tag = 'scoped memory for tpu_custom_call.1']
    %10 = vsyncpa [#allocation3], 0
    %s11 = scalar_lea.sflag [#allocation3], 1
    %12 = vsyncpa %s11, 0
    %13 = vsyncpa [#allocation6], 0
    %s14 = scalar_lea.sflag [#allocation6], 1
    %15 = vsyncpa %s14, 0
    %16 = vsyncpa [#allocation4], 0
    %s17 = scalar_lea.sflag [#allocation4], 1
    %18 = vsyncpa %s17, 0
    %19 = vsyncpa [#allocation10], 0
    %s20 = scalar_lea.sflag [#allocation10], 1
    %21 = vsyncpa %s20, 0
    loop: start=0, step=1, limit=4
    $region2: #{tpu_custom_call.1} parent=1 // loop_pre_header
      _
    $region3: #{tpu_custom_call.1} parent=1 // loop_header
      %s23 = sphi 0, %s27
      %p24 = scmp.ge.s32.totalorder %s23, 4
      %s33 = sphi 0, %s35
      %s36 = sphi 0, %s33
      %s37 = sphi 0, %s36
      %s53 = sphi 0, %s37
      %s59 = sphi 0, %s61
      %s62 = sphi 0, %s59
      %s63 = sphi 0, %s62
      %s79 = sphi 0, %s63
      %s85 = sphi 0, %s87
      %s88 = sphi 0, %s85
      %s89 = sphi 0, %s88
      %s105 = sphi 0, %s89
      %s111 = sphi 0, %s113
      %s114 = sphi 0, %s111
      %s115 = sphi 0, %s114
      %s131 = sphi 0, %s115
      %s137 = sphi 0, %s139
      %s140 = sphi 0, %s137
      %s141 = sphi 0, %s140
      %s157 = sphi 0, %s141
    $region4: #{tpu_custom_call.1} parent=1 // loop_header_branch
      %26 = sbr.rel (%p24) target = $region8
    $region5: #{tpu_custom_call.1} parent=1 // loop_body
      %s28 = ssub.s32 %s23, 1
      %s29 = ssub.s32 %s23, 2
      %s30 = sadd.s32 %s23, 1
      %s31 = ssub.s32 %s23, %s30
      %p32 = scmp.eq.s32.totalorder %s31, 0
      %s34 = sadd.s32 %s33, 1
      %s35 = scalar_select %p32, %s33, %s34
      %p38 = pneg %p32
      %p39 = scmp.eq.s32.totalorder %s23, 1
      %p40 = por %p38, %p39
      %p41 = scmp.ne.s32.totalorder %s33, %s36
      %p42 = scmp.eq.s32.totalorder %s23, 0
      %p43 = por %p41, %p42
      %p44 = scmp.ne.s32.totalorder %s33, %s36
      %p45 = scmp.eq.s32.totalorder %s28, 1
      %p46 = por %p44, %p45
      %p47 = scmp.ne.s32.totalorder %s36, %s37
      %p48 = scmp.eq.s32.totalorder %s28, 0
      %p49 = por %p47, %p48
      %p50 = scmp.ne.s32.totalorder %s36, %s37
      %p51 = scmp.eq.s32.totalorder %s29, 1
      %p52 = por %p50, %p51
      %p54 = scmp.ne.s32.totalorder %s37, %s53
      %p55 = scmp.eq.s32.totalorder %s29, 0
      %p56 = por %p54, %p55
      %s57 = ssub.s32 %s23, %s30
      %p58 = scmp.eq.s32.totalorder %s57, 0
      %s60 = sadd.s32 %s59, 1
      %s61 = scalar_select %p58, %s59, %s60
      %p64 = pneg %p58
      %p65 = scmp.eq.s32.totalorder %s23, 1
      %p66 = por %p64, %p65
      %p67 = scmp.ne.s32.totalorder %s59, %s62
      %p68 = scmp.eq.s32.totalorder %s23, 0
      %p69 = por %p67, %p68
      %p70 = scmp.ne.s32.totalorder %s59, %s62
      %p71 = scmp.eq.s32.totalorder %s28, 1
      %p72 = por %p70, %p71
      %p73 = scmp.ne.s32.totalorder %s62, %s63
      %p74 = scmp.eq.s32.totalorder %s28, 0
      %p75 = por %p73, %p74
      %p76 = scmp.ne.s32.totalorder %s62, %s63
      %p77 = scmp.eq.s32.totalorder %s29, 1
      %p78 = por %p76, %p77
      %p80 = scmp.ne.s32.totalorder %s63, %s79
      %p81 = scmp.eq.s32.totalorder %s29, 0
      %p82 = por %p80, %p81
      %s83 = ssub.s32 %s23, %s30
      %p84 = scmp.eq.s32.totalorder %s83, 0
      %s86 = sadd.s32 %s85, 1
      %s87 = scalar_select %p84, %s85, %s86
      %p90 = pneg %p84
      %p91 = scmp.eq.s32.totalorder %s23, 1
      %p92 = por %p90, %p91
      %p93 = scmp.ne.s32.totalorder %s85, %s88
      %p94 = scmp.eq.s32.totalorder %s23, 0
      %p95 = por %p93, %p94
      %p96 = scmp.ne.s32.totalorder %s85, %s88
      %p97 = scmp.eq.s32.totalorder %s28, 1
      %p98 = por %p96, %p97
      %p99 = scmp.ne.s32.totalorder %s88, %s89
      %p100 = scmp.eq.s32.totalorder %s28, 0
      %p101 = por %p99, %p100
      %p102 = scmp.ne.s32.totalorder %s88, %s89
      %p103 = scmp.eq.s32.totalorder %s29, 1
      %p104 = por %p102, %p103
      %p106 = scmp.ne.s32.totalorder %s89, %s105
      %p107 = scmp.eq.s32.totalorder %s29, 0
      %p108 = por %p106, %p107
      %s109 = ssub.s32 %s23, %s30
      %p110 = scmp.eq.s32.totalorder %s109, 0
      %s112 = sadd.s32 %s111, 1
      %s113 = scalar_select %p110, %s111, %s112
      %p116 = pneg %p110
      %p117 = scmp.eq.s32.totalorder %s23, 1
      %p118 = por %p116, %p117
      %p119 = scmp.ne.s32.totalorder %s111, %s114
      %p120 = scmp.eq.s32.totalorder %s23, 0
      %p121 = por %p119, %p120
      %p122 = scmp.ne.s32.totalorder %s111, %s114
      %p123 = scmp.eq.s32.totalorder %s28, 1
      %p124 = por %p122, %p123
      %p125 = scmp.ne.s32.totalorder %s114, %s115
      %p126 = scmp.eq.s32.totalorder %s28, 0
      %p127 = por %p125, %p126
      %p128 = scmp.ne.s32.totalorder %s114, %s115
      %p129 = scmp.eq.s32.totalorder %s29, 1
      %p130 = por %p128, %p129
      %p132 = scmp.ne.s32.totalorder %s115, %s131
      %p133 = scmp.eq.s32.totalorder %s29, 0
      %p134 = por %p132, %p133
      %s135 = ssub.s32 %s23, %s30
      %p136 = scmp.eq.s32.totalorder %s135, 0
      %s138 = sadd.s32 %s137, 1
      %s139 = scalar_select %p136, %s137, %s138
      %p142 = pneg %p136
      %p143 = scmp.eq.s32.totalorder %s23, 1
      %p144 = por %p142, %p143
      %p145 = scmp.ne.s32.totalorder %s137, %s140
      %p146 = scmp.eq.s32.totalorder %s23, 0
      %p147 = por %p145, %p146
      %p148 = scmp.ne.s32.totalorder %s137, %s140
      %p149 = scmp.eq.s32.totalorder %s28, 1
      %p150 = por %p148, %p149
      %p151 = scmp.ne.s32.totalorder %s140, %s141
      %p152 = scmp.eq.s32.totalorder %s28, 0
      %p153 = por %p151, %p152
      %p154 = scmp.ne.s32.totalorder %s140, %s141
      %p155 = scmp.eq.s32.totalorder %s29, 1
      %p156 = por %p154, %p155
      %p158 = scmp.ne.s32.totalorder %s141, %s157
      %p159 = scmp.eq.s32.totalorder %s29, 0
      %p160 = por %p158, %p159
      %p161 = scmp.le.s32.totalorder 1, %s23
      %p162 = scmp.lt.s32.totalorder %s23, 3
      %p163 = pnand %p161, %p162
      %p164 = pneg %p163
      // Predicated region
      $region9: #{tpu_custom_call.1} parent=5 // pred_check
        _
      $region10: #{tpu_custom_call.1} parent=5 // pred_check_branch
        %166 = sbr.rel (%p163) target = $region12
      $region11: #{tpu_custom_call.1} parent=5 // pred_region
        %s167 = ssub.s32 %s23, 1
      $region12: #{tpu_custom_call.1} parent=5 // pred_fallthru
        _
      %p168 = scmp.lt.s32.totalorder %s23, 2
      // Predicated region
      $region13: #{tpu_custom_call.1} parent=5 // pred_check
        %p169 = pneg %p168
      $region14: #{tpu_custom_call.1} parent=5 // pred_check_branch
        %171 = sbr.rel (%p169) target = $region16
      $region15: #{tpu_custom_call.1} parent=5 // pred_region
        // Predicated region
        $region17: #{tpu_custom_call.1} parent=15 // pred_check
          %p172 = pneg %p43
        $region18: #{tpu_custom_call.1} parent=15 // pred_check_branch
          %174 = sbr.rel (%p172) target = $region20
        $region19: #{tpu_custom_call.1} parent=15 // pred_region
          %s175 = sand.u32 %s33, 1
          %s176 = scalar_lea.sflag [#allocation3], %s175
          %s177 = sand.u32 %s33, 1
          %s178 = smul.addr %s177, 64
          %s179 = scalar_lea.vmem [#allocation2], %s178
          %s180 = smul.u32 4, %s23
          %182 = vsyncadd %s176, 0
          %s183 = smul.addr %s180, 2
          %s184 = smul.addr %s183, 8
          %s185 = scalar_lea.hbm %s0, %s184
          %s186 = sshll.u32 %s185, 4
          %s187 = int_to_ptr.hbm [resolvable:$true] %s186
          %s188 = sshll.u32 %s179, 4
          %s189 = int_to_ptr.vmem [resolvable:$true] %s188
          %194 = dma.hbm_to_vmem [thread:$0]  %s187, 1024, %s189, %s176, 128, 128, 8
        $region20: #{tpu_custom_call.1} parent=15 // pred_fallthru
          _
        // Predicated region
        $region21: #{tpu_custom_call.1} parent=15 // pred_check
          %p195 = pneg %p69
        $region22: #{tpu_custom_call.1} parent=15 // pred_check_branch
          %197 = sbr.rel (%p195) target = $region24
        $region23: #{tpu_custom_call.1} parent=15 // pred_region
          %s198 = sand.u32 %s23, 1
          %s199 = scalar_lea.sflag [#allocation6], %s198
          %s200 = sand.u32 %s59, 1
          %s201 = smul.addr %s200, 512
          %s202 = scalar_lea.vmem [#allocation5], %s201
          %s203 = smul.u32 4, %s23
          %205 = vsyncadd %s199, 0
          %s206 = smul.addr %s203, 16
          %s207 = smul.addr %s206, 8
          %s208 = scalar_lea.hbm %s1, %s207
          %s209 = sshll.u32 %s208, 4
          %s210 = int_to_ptr.hbm [resolvable:$true] %s209
          %s211 = sshll.u32 %s202, 4
          %s212 = int_to_ptr.vmem [resolvable:$true] %s211
          %217 = dma.hbm_to_vmem [thread:$0]  %s210, 8192, %s212, %s199, 128, 128, 8
        $region24: #{tpu_custom_call.1} parent=15 // pred_fallthru
          _
        // Predicated region
        $region25: #{tpu_custom_call.1} parent=15 // pred_check
          %p218 = pneg %p95
        $region26: #{tpu_custom_call.1} parent=15 // pred_check_branch
          %220 = sbr.rel (%p218) target = $region28
        $region27: #{tpu_custom_call.1} parent=15 // pred_region
          %s221 = sand.u32 %s23, 1
          %s222 = scalar_lea.sflag [#allocation6], %s221
          %s223 = sand.u32 %s85, 1
          %s224 = smul.addr %s223, 512
          %s225 = scalar_lea.vmem [#allocation7], %s224
          %s226 = smul.u32 4, %s23
          %228 = vsyncadd %s222, 0
          %s229 = smul.addr %s226, 16
          %s230 = smul.addr %s229, 8
          %s231 = scalar_lea.hbm %s2, %s230
          %s232 = sshll.u32 %s231, 4
          %s233 = int_to_ptr.hbm [resolvable:$true] %s232
          %s234 = sshll.u32 %s225, 4
          %s235 = int_to_ptr.vmem [resolvable:$true] %s234
          %240 = dma.hbm_to_vmem [thread:$0]  %s233, 8192, %s235, %s222, 128, 128, 8
        $region28: #{tpu_custom_call.1} parent=15 // pred_fallthru
          _
      $region16: #{tpu_custom_call.1} parent=5 // pred_fallthru
        _
      %p241 = scmp.le.s32.totalorder 1, %s23
      %p242 = scmp.lt.s32.totalorder %s23, 3
      %p243 = pnand %p241, %p242
      %p244 = pneg %p243
      // Predicated region
      $region29: #{tpu_custom_call.1} parent=5 // pred_check
        _
      $region30: #{tpu_custom_call.1} parent=5 // pred_check_branch
        %246 = sbr.rel (%p243) target = $region32
      $region31: #{tpu_custom_call.1} parent=5 // pred_region
        %s247 = ssub.s32 %s23, 1
        %s248 = sand.u32 %s36, 1
        %s249 = scalar_lea.sflag [#allocation3], %s248
        %s250 = sand.u32 %s36, 1
        %s251 = smul.addr %s250, 64
        %s252 = scalar_lea.vmem [#allocation2], %s251
        // Predicated region
        $region33: #{tpu_custom_call.1} parent=31 // pred_check
          %p253 = pneg %p49
        $region34: #{tpu_custom_call.1} parent=31 // pred_check_branch
          %255 = sbr.rel (%p253) target = $region36
        $region35: #{tpu_custom_call.1} parent=31 // pred_region
          %257 = dma.done %s249, 1024
        $region36: #{tpu_custom_call.1} parent=31 // pred_fallthru
          _
        %s258 = sand.u32 %s28, 1
        %s259 = scalar_lea.sflag [#allocation6], %s258
        %s260 = sand.u32 %s62, 1
        %s261 = smul.addr %s260, 512
        %s262 = scalar_lea.vmem [#allocation5], %s261
        // Predicated region
        $region37: #{tpu_custom_call.1} parent=31 // pred_check
          %p263 = pneg %p75
        $region38: #{tpu_custom_call.1} parent=31 // pred_check_branch
          %265 = sbr.rel (%p263) target = $region40
        $region39: #{tpu_custom_call.1} parent=31 // pred_region
          %267 = dma.done %s259, 8192
        $region40: #{tpu_custom_call.1} parent=31 // pred_fallthru
          _
        %s268 = sand.u32 %s28, 1
        %s269 = scalar_lea.sflag [#allocation6], %s268
        %s270 = sand.u32 %s88, 1
        %s271 = smul.addr %s270, 512
        %s272 = scalar_lea.vmem [#allocation7], %s271
        // Predicated region
        $region41: #{tpu_custom_call.1} parent=31 // pred_check
          %p273 = pneg %p101
        $region42: #{tpu_custom_call.1} parent=31 // pred_check_branch
          %275 = sbr.rel (%p273) target = $region44
        $region43: #{tpu_custom_call.1} parent=31 // pred_region
          %277 = dma.done %s269, 8192
        $region44: #{tpu_custom_call.1} parent=31 // pred_fallthru
          _
        %s278 = sand.u32 %s36, 1
        %s279 = scalar_lea.sflag [#allocation3], %s278
        %s280 = sand.u32 %s36, 1
        %s281 = smul.addr %s280, 64
        %s282 = scalar_lea.vmem [#allocation2], %s281
        %p283 = pneg %p49
        %p284 = pneg %p46
        %s285 = sand.u32 %s28, 1
        %s286 = scalar_lea.sflag [#allocation6], %s285
        %s287 = sand.u32 %s62, 1
        %s288 = smul.addr %s287, 512
        %s289 = scalar_lea.vmem [#allocation5], %s288
        %p290 = pneg %p75
        %p291 = pneg %p72
        %s292 = sand.u32 %s28, 1
        %s293 = scalar_lea.sflag [#allocation6], %s292
        %s294 = sand.u32 %s88, 1
        %s295 = smul.addr %s294, 512
        %s296 = scalar_lea.vmem [#allocation7], %s295
        %p297 = pneg %p101
        %p298 = pneg %p98
        %p299 = pneg %p127
        %p300 = pneg %p124
        %s301 = sand.u32 %s114, 1
        %s302 = scalar_lea.sflag [#allocation4], %s301
        %s303 = sand.u32 %s114, 1
        %s304 = smul.addr %s303, 64
        %s305 = scalar_lea.vmem [#allocation8], %s304
        %p306 = pneg %p153
        %p307 = pneg %p150
        %s308 = sand.u32 %s140, 1
        %s309 = scalar_lea.sflag [#allocation10], %s308
        %s310 = sand.u32 %s140, 1
        %s311 = smul.addr %s310, 64
        %s312 = scalar_lea.vmem [#allocation9], %s311
        %s313 = smul.u32 4, %s28
        %s314 = smul.u32 4, %s28
        %s315 = smul.u32 4, %s28
        %s316 = smul.u32 4, %s28
        %s317 = smul.u32 4, %s28
        %v318 = vld [vmem:[%s252] sm:$0xff]
        %v319 = vld [vmem:[%s252 + $0x8] sm:$0xff]
        %v320 = vld [vmem:[%s252 + $0x10] sm:$0xff]
        %v321 = vld [vmem:[%s252 + $0x18] sm:$0xff]
        %v322 = vld [vmem:[%s252 + $0x20] sm:$0xff]
        %v323 = vld [vmem:[%s252 + $0x28] sm:$0xff]
        %v324 = vld [vmem:[%s252 + $0x30] sm:$0xff]
        %v325 = vld [vmem:[%s252 + $0x38] sm:$0xff]
        %v326 = vld [vmem:[%s262] sm:$0xff]
        %v327 = vld [vmem:[%s262 + $0x8] sm:$0xff]
        %v328 = vld [vmem:[%s262 + $0x10] sm:$0xff]
        %v329 = vld [vmem:[%s262 + $0x18] sm:$0xff]
        %v330 = vld [vmem:[%s262 + $0x20] sm:$0xff]
        %v331 = vld [vmem:[%s262 + $0x28] sm:$0xff]
        %v332 = vld [vmem:[%s262 + $0x30] sm:$0xff]
        %v333 = vld [vmem:[%s262 + $0x38] sm:$0xff]
        %v334 = vld [vmem:[%s262 + $0x40] sm:$0xff]
        %v335 = vld [vmem:[%s262 + $0x48] sm:$0xff]
        %v336 = vld [vmem:[%s262 + $0x50] sm:$0xff]
        %v337 = vld [vmem:[%s262 + $0x58] sm:$0xff]
        %v338 = vld [vmem:[%s262 + $0x60] sm:$0xff]
        %v339 = vld [vmem:[%s262 + $0x68] sm:$0xff]
        %v340 = vld [vmem:[%s262 + $0x70] sm:$0xff]
        %v341 = vld [vmem:[%s262 + $0x78] sm:$0xff]
        %v342 = vld [vmem:[%s262 + $0x80] sm:$0xff]
        %v343 = vld [vmem:[%s262 + $0x88] sm:$0xff]
        %v344 = vld [vmem:[%s262 + $0x90] sm:$0xff]
        %v345 = vld [vmem:[%s262 + $0x98] sm:$0xff]
        %v346 = vld [vmem:[%s262 + $0xa0] sm:$0xff]
        %v347 = vld [vmem:[%s262 + $0xa8] sm:$0xff]
        %v348 = vld [vmem:[%s262 + $0xb0] sm:$0xff]
        %v349 = vld [vmem:[%s262 + $0xb8] sm:$0xff]
        %v350 = vld [vmem:[%s262 + $0xc0] sm:$0xff]
        %v351 = vld [vmem:[%s262 + $0xc8] sm:$0xff]
        %v352 = vld [vmem:[%s262 + $0xd0] sm:$0xff]
        %v353 = vld [vmem:[%s262 + $0xd8] sm:$0xff]
        %v354 = vld [vmem:[%s262 + $0xe0] sm:$0xff]
        %v355 = vld [vmem:[%s262 + $0xe8] sm:$0xff]
        %v356 = vld [vmem:[%s262 + $0xf0] sm:$0xff]
        %v357 = vld [vmem:[%s262 + $0xf8] sm:$0xff]
        %v358 = vld [vmem:[%s262 + $0x100] sm:$0xff]
        %v359 = vld [vmem:[%s262 + $0x108] sm:$0xff]
        %v360 = vld [vmem:[%s262 + $0x110] sm:$0xff]
        %v361 = vld [vmem:[%s262 + $0x118] sm:$0xff]
        %v362 = vld [vmem:[%s262 + $0x120] sm:$0xff]
        %v363 = vld [vmem:[%s262 + $0x128] sm:$0xff]
        %v364 = vld [vmem:[%s262 + $0x130] sm:$0xff]
        %v365 = vld [vmem:[%s262 + $0x138] sm:$0xff]
        %v366 = vld [vmem:[%s262 + $0x140] sm:$0xff]
        %v367 = vld [vmem:[%s262 + $0x148] sm:$0xff]
        %v368 = vld [vmem:[%s262 + $0x150] sm:$0xff]
        %v369 = vld [vmem:[%s262 + $0x158] sm:$0xff]
        %v370 = vld [vmem:[%s262 + $0x160] sm:$0xff]
        %v371 = vld [vmem:[%s262 + $0x168] sm:$0xff]
        %v372 = vld [vmem:[%s262 + $0x170] sm:$0xff]
        %v373 = vld [vmem:[%s262 + $0x178] sm:$0xff]
        %v374 = vld [vmem:[%s262 + $0x180] sm:$0xff]
        %v375 = vld [vmem:[%s262 + $0x188] sm:$0xff]
        %v376 = vld [vmem:[%s262 + $0x190] sm:$0xff]
        %v377 = vld [vmem:[%s262 + $0x198] sm:$0xff]
        %v378 = vld [vmem:[%s262 + $0x1a0] sm:$0xff]
        %v379 = vld [vmem:[%s262 + $0x1a8] sm:$0xff]
        %v380 = vld [vmem:[%s262 + $0x1b0] sm:$0xff]
        %v381 = vld [vmem:[%s262 + $0x1b8] sm:$0xff]
        %v382 = vld [vmem:[%s262 + $0x1c0] sm:$0xff]
        %v383 = vld [vmem:[%s262 + $0x1c8] sm:$0xff]
        %v384 = vld [vmem:[%s262 + $0x1d0] sm:$0xff]
        %v385 = vld [vmem:[%s262 + $0x1d8] sm:$0xff]
        %v386 = vld [vmem:[%s262 + $0x1e0] sm:$0xff]
        %v387 = vld [vmem:[%s262 + $0x1e8] sm:$0xff]
        %v388 = vld [vmem:[%s262 + $0x1f0] sm:$0xff]
        %v389 = vld [vmem:[%s262 + $0x1f8] sm:$0xff]
        %v390 = vld [vmem:[%s272] sm:$0xff]
        %v391 = vld [vmem:[%s272 + $0x8] sm:$0xff]
        %v392 = vld [vmem:[%s272 + $0x10] sm:$0xff]
        %v393 = vld [vmem:[%s272 + $0x18] sm:$0xff]
        %v394 = vld [vmem:[%s272 + $0x20] sm:$0xff]
        %v395 = vld [vmem:[%s272 + $0x28] sm:$0xff]
        %v396 = vld [vmem:[%s272 + $0x30] sm:$0xff]
        %v397 = vld [vmem:[%s272 + $0x38] sm:$0xff]
        %v398 = vld [vmem:[%s272 + $0x40] sm:$0xff]
        %v399 = vld [vmem:[%s272 + $0x48] sm:$0xff]
        %v400 = vld [vmem:[%s272 + $0x50] sm:$0xff]
        %v401 = vld [vmem:[%s272 + $0x58] sm:$0xff]
        %v402 = vld [vmem:[%s272 + $0x60] sm:$0xff]
        %v403 = vld [vmem:[%s272 + $0x68] sm:$0xff]
        %v404 = vld [vmem:[%s272 + $0x70] sm:$0xff]
        %v405 = vld [vmem:[%s272 + $0x78] sm:$0xff]
        %v406 = vld [vmem:[%s272 + $0x80] sm:$0xff]
        %v407 = vld [vmem:[%s272 + $0x88] sm:$0xff]
        %v408 = vld [vmem:[%s272 + $0x90] sm:$0xff]
        %v409 = vld [vmem:[%s272 + $0x98] sm:$0xff]
        %v410 = vld [vmem:[%s272 + $0xa0] sm:$0xff]
        %v411 = vld [vmem:[%s272 + $0xa8] sm:$0xff]
        %v412 = vld [vmem:[%s272 + $0xb0] sm:$0xff]
        %v413 = vld [vmem:[%s272 + $0xb8] sm:$0xff]
        %v414 = vld [vmem:[%s272 + $0xc0] sm:$0xff]
        %v415 = vld [vmem:[%s272 + $0xc8] sm:$0xff]
        %v416 = vld [vmem:[%s272 + $0xd0] sm:$0xff]
        %v417 = vld [vmem:[%s272 + $0xd8] sm:$0xff]
        %v418 = vld [vmem:[%s272 + $0xe0] sm:$0xff]
        %v419 = vld [vmem:[%s272 + $0xe8] sm:$0xff]
        %v420 = vld [vmem:[%s272 + $0xf0] sm:$0xff]
        %v421 = vld [vmem:[%s272 + $0xf8] sm:$0xff]
        %v422 = vld [vmem:[%s272 + $0x100] sm:$0xff]
        %v423 = vld [vmem:[%s272 + $0x108] sm:$0xff]
        %v424 = vld [vmem:[%s272 + $0x110] sm:$0xff]
        %v425 = vld [vmem:[%s272 + $0x118] sm:$0xff]
        %v426 = vld [vmem:[%s272 + $0x120] sm:$0xff]
        %v427 = vld [vmem:[%s272 + $0x128] sm:$0xff]
        %v428 = vld [vmem:[%s272 + $0x130] sm:$0xff]
        %v429 = vld [vmem:[%s272 + $0x138] sm:$0xff]
        %v430 = vld [vmem:[%s272 + $0x140] sm:$0xff]
        %v431 = vld [vmem:[%s272 + $0x148] sm:$0xff]
        %v432 = vld [vmem:[%s272 + $0x150] sm:$0xff]
        %v433 = vld [vmem:[%s272 + $0x158] sm:$0xff]
        %v434 = vld [vmem:[%s272 + $0x160] sm:$0xff]
        %v435 = vld [vmem:[%s272 + $0x168] sm:$0xff]
        %v436 = vld [vmem:[%s272 + $0x170] sm:$0xff]
        %v437 = vld [vmem:[%s272 + $0x178] sm:$0xff]
        %v438 = vld [vmem:[%s272 + $0x180] sm:$0xff]
        %v439 = vld [vmem:[%s272 + $0x188] sm:$0xff]
        %v440 = vld [vmem:[%s272 + $0x190] sm:$0xff]
        %v441 = vld [vmem:[%s272 + $0x198] sm:$0xff]
        %v442 = vld [vmem:[%s272 + $0x1a0] sm:$0xff]
        %v443 = vld [vmem:[%s272 + $0x1a8] sm:$0xff]
        %v444 = vld [vmem:[%s272 + $0x1b0] sm:$0xff]
        %v445 = vld [vmem:[%s272 + $0x1b8] sm:$0xff]
        %v446 = vld [vmem:[%s272 + $0x1c0] sm:$0xff]
        %v447 = vld [vmem:[%s272 + $0x1c8] sm:$0xff]
        %v448 = vld [vmem:[%s272 + $0x1d0] sm:$0xff]
        %v449 = vld [vmem:[%s272 + $0x1d8] sm:$0xff]
        %v450 = vld [vmem:[%s272 + $0x1e0] sm:$0xff]
        %v451 = vld [vmem:[%s272 + $0x1e8] sm:$0xff]
        %v452 = vld [vmem:[%s272 + $0x1f0] sm:$0xff]
        %v453 = vld [vmem:[%s272 + $0x1f8] sm:$0xff]
        %454 = vmatpush.xpose.msra.mxu0 %v341
        %455 = vmatpush.xpose.msra.mxu0 %v340
        %456 = vmatpush.xpose.msra.mxu0 %v339
        %457 = vmatpush.xpose.msra.mxu0 %v338
        %458 = vmatpush.xpose.msra.mxu0 %v337
        %459 = vmatpush.xpose.msra.mxu0 %v336
        %460 = vmatpush.xpose.msra.mxu0 %v335
        %461 = vmatpush.xpose.msra.mxu0 %v334
        %462 = vmatpush.xpose.msra.mxu0 %v333
        %463 = vmatpush.xpose.msra.mxu0 %v332
        %464 = vmatpush.xpose.msra.mxu0 %v331
        %465 = vmatpush.xpose.msra.mxu0 %v330
        %466 = vmatpush.xpose.msra.mxu0 %v329
        %467 = vmatpush.xpose.msra.mxu0 %v328
        %468 = vmatpush.xpose.msra.mxu0 %v327
        %469 = vmatpush.xpose.msra.mxu0 %v326
        %470 = vmatmul.f32.gmra.mxu0 %v318
        %v471 = vpop.f32.mrf.mxu0
        %v472 = vadd.f32 0.0, %v471
        %473 = vmatmul.f32.gmra.mxu0 %v319
        %v474 = vpop.f32.mrf.mxu0
        %v475 = vadd.f32 0.0, %v474
        %476 = vdwg.mxu0
        %477 = vmatpush.xpose.msra.mxu0 %v357
        %478 = vmatpush.xpose.msra.mxu0 %v356
        %479 = vmatpush.xpose.msra.mxu0 %v355
        %480 = vmatpush.xpose.msra.mxu0 %v354
        %481 = vmatpush.xpose.msra.mxu0 %v353
        %482 = vmatpush.xpose.msra.mxu0 %v352
        %483 = vmatpush.xpose.msra.mxu0 %v351
        %484 = vmatpush.xpose.msra.mxu0 %v350
        %485 = vmatpush.xpose.msra.mxu0 %v349
        %486 = vmatpush.xpose.msra.mxu0 %v348
        %487 = vmatpush.xpose.msra.mxu0 %v347
        %488 = vmatpush.xpose.msra.mxu0 %v346
        %489 = vmatpush.xpose.msra.mxu0 %v345
        %490 = vmatpush.xpose.msra.mxu0 %v344
        %491 = vmatpush.xpose.msra.mxu0 %v343
        %492 = vmatpush.xpose.msra.mxu0 %v342
        %493 = vmatmul.f32.gmra.mxu0 %v320
        %v494 = vpop.f32.mrf.mxu0
        %v495 = vadd.f32 0.0, %v494
        %496 = vmatmul.f32.gmra.mxu0 %v321
        %v497 = vpop.f32.mrf.mxu0
        %v498 = vadd.f32 0.0, %v497
        %499 = vdwg.mxu0
        %500 = vmatpush.xpose.msra.mxu0 %v373
        %501 = vmatpush.xpose.msra.mxu0 %v372
        %502 = vmatpush.xpose.msra.mxu0 %v371
        %503 = vmatpush.xpose.msra.mxu0 %v370
        %504 = vmatpush.xpose.msra.mxu0 %v369
        %505 = vmatpush.xpose.msra.mxu0 %v368
        %506 = vmatpush.xpose.msra.mxu0 %v367
        %507 = vmatpush.xpose.msra.mxu0 %v366
        %508 = vmatpush.xpose.msra.mxu0 %v365
        %509 = vmatpush.xpose.msra.mxu0 %v364
        %510 = vmatpush.xpose.msra.mxu0 %v363
        %511 = vmatpush.xpose.msra.mxu0 %v362
        %512 = vmatpush.xpose.msra.mxu0 %v361
        %513 = vmatpush.xpose.msra.mxu0 %v360
        %514 = vmatpush.xpose.msra.mxu0 %v359
        %515 = vmatpush.xpose.msra.mxu0 %v358
        %516 = vmatmul.f32.gmra.mxu0 %v322
        %v517 = vpop.f32.mrf.mxu0
        %v518 = vadd.f32 0.0, %v517
        %519 = vmatmul.f32.gmra.mxu0 %v323
        %v520 = vpop.f32.mrf.mxu0
        %v521 = vadd.f32 0.0, %v520
        %522 = vdwg.mxu0
        %523 = vmatpush.xpose.msra.mxu0 %v389
        %524 = vmatpush.xpose.msra.mxu0 %v388
        %525 = vmatpush.xpose.msra.mxu0 %v387
        %526 = vmatpush.xpose.msra.mxu0 %v386
        %527 = vmatpush.xpose.msra.mxu0 %v385
        %528 = vmatpush.xpose.msra.mxu0 %v384
        %529 = vmatpush.xpose.msra.mxu0 %v383
        %530 = vmatpush.xpose.msra.mxu0 %v382
        %531 = vmatpush.xpose.msra.mxu0 %v381
        %532 = vmatpush.xpose.msra.mxu0 %v380
        %533 = vmatpush.xpose.msra.mxu0 %v379
        %534 = vmatpush.xpose.msra.mxu0 %v378
        %535 = vmatpush.xpose.msra.mxu0 %v377
        %536 = vmatpush.xpose.msra.mxu0 %v376
        %537 = vmatpush.xpose.msra.mxu0 %v375
        %538 = vmatpush.xpose.msra.mxu0 %v374
        %539 = vmatmul.f32.gmra.mxu0 %v324
        %v540 = vpop.f32.mrf.mxu0
        %v541 = vadd.f32 0.0, %v540
        %542 = vmatmul.f32.gmra.mxu0 %v325
        %v543 = vpop.f32.mrf.mxu0
        %v544 = vadd.f32 0.0, %v543
        %545 = vdwg.mxu0
        %v546 = vmul.f32 %v472, 0.17677669
        %v547 = vmul.f32 %v475, 0.17677669
        %v548 = vmul.f32 %v495, 0.17677669
        %v549 = vmul.f32 %v498, 0.17677669
        %v550 = vmul.f32 %v518, 0.17677669
        %v551 = vmul.f32 %v521, 0.17677669
        %v552 = vmul.f32 %v541, 0.17677669
        %v553 = vmul.f32 %v544, 0.17677669
        %v554 = vlaneseq
        %v555 = vand.u32 %v554, 127
        %vm556 = vcmp.lt.s32.totalorder %v555, 16
        %v557 = vsel %vm556, %v546, -1e+30
        %v558 = vsel %vm556, %v547, -1e+30
        %v559 = vsel %vm556, %v548, -1e+30
        %v560 = vsel %vm556, %v549, -1e+30
        %v561 = vsel %vm556, %v550, -1e+30
        %v562 = vsel %vm556, %v551, -1e+30
        %v563 = vsel %vm556, %v552, -1e+30
        %v564 = vsel %vm556, %v553, -1e+30
        %565 = vmax.xlane.f32.xlu0 %v557
        %v566 = vpop.xlane.xlu0 %565
        %567 = vmax.xlane.f32.xlu0 %v558
        %v568 = vpop.xlane.xlu0 %567
        %569 = vmax.xlane.f32.xlu0 %v559
        %v570 = vpop.xlane.xlu0 %569
        %571 = vmax.xlane.f32.xlu0 %v560
        %v572 = vpop.xlane.xlu0 %571
        %573 = vmax.xlane.f32.xlu0 %v561
        %v574 = vpop.xlane.xlu0 %573
        %575 = vmax.xlane.f32.xlu0 %v562
        %v576 = vpop.xlane.xlu0 %575
        %577 = vmax.xlane.f32.xlu0 %v563
        %v578 = vpop.xlane.xlu0 %577
        %579 = vmax.xlane.f32.xlu0 %v564
        %v580 = vpop.xlane.xlu0 %579
        %v581 = vsub.f32 %v557, %v566
        %v582 = vsub.f32 %v558, %v568
        %v583 = vsub.f32 %v559, %v570
        %v584 = vsub.f32 %v560, %v572
        %v585 = vsub.f32 %v561, %v574
        %v586 = vsub.f32 %v562, %v576
        %v587 = vsub.f32 %v563, %v578
        %v588 = vsub.f32 %v564, %v580
        %v589 = vmul.f32 %v581, 1.442695
        %v590 = vpow.pop %v589
        %v591 = vmul.f32 %v582, 1.442695
        %v592 = vpow.pop %v591
        %v593 = vmul.f32 %v583, 1.442695
        %v594 = vpow.pop %v593
        %v595 = vmul.f32 %v584, 1.442695
        %v596 = vpow.pop %v595
        %v597 = vmul.f32 %v585, 1.442695
        %v598 = vpow.pop %v597
        %v599 = vmul.f32 %v586, 1.442695
        %v600 = vpow.pop %v599
        %v601 = vmul.f32 %v587, 1.442695
        %v602 = vpow.pop %v601
        %v603 = vmul.f32 %v588, 1.442695
        %v604 = vpow.pop %v603
        %605 = vadd.xlane.f32.xlu0 %v590
        %v606 = vpop.xlane.xlu0 %605
        %607 = vadd.xlane.f32.xlu0 %v592
        %v608 = vpop.xlane.xlu0 %607
        %609 = vadd.xlane.f32.xlu0 %v594
        %v610 = vpop.xlane.xlu0 %609
        %611 = vadd.xlane.f32.xlu0 %v596
        %v612 = vpop.xlane.xlu0 %611
        %613 = vadd.xlane.f32.xlu0 %v598
        %v614 = vpop.xlane.xlu0 %613
        %615 = vadd.xlane.f32.xlu0 %v600
        %v616 = vpop.xlane.xlu0 %615
        %617 = vadd.xlane.f32.xlu0 %v602
        %v618 = vpop.xlane.xlu0 %617
        %619 = vadd.xlane.f32.xlu0 %v604
        %v620 = vpop.xlane.xlu0 %619
        %v621 = vrcp.pop %v606
        %v622 = vrcp.pop %v608
        %v623 = vrcp.pop %v610
        %v624 = vrcp.pop %v612
        %v625 = vrcp.pop %v614
        %v626 = vrcp.pop %v616
        %v627 = vrcp.pop %v618
        %v628 = vrcp.pop %v620
        %v629 = vmul.f32 %v590, %v621
        %v630 = vmul.f32 %v592, %v622
        %v631 = vmul.f32 %v594, %v623
        %v632 = vmul.f32 %v596, %v624
        %v633 = vmul.f32 %v598, %v625
        %v634 = vmul.f32 %v600, %v626
        %v635 = vmul.f32 %v602, %v627
        %v636 = vmul.f32 %v604, %v628
        %637 = vst [vmem:[%s312] sm:$0xff] %v629
        %638 = vst [vmem:[%s312 + $0x8] sm:$0xff] %v630
        %639 = vst [vmem:[%s312 + $0x10] sm:$0xff] %v631
        %640 = vst [vmem:[%s312 + $0x18] sm:$0xff] %v632
        %641 = vst [vmem:[%s312 + $0x20] sm:$0xff] %v633
        %642 = vst [vmem:[%s312 + $0x28] sm:$0xff] %v634
        %643 = vst [vmem:[%s312 + $0x30] sm:$0xff] %v635
        %644 = vst [vmem:[%s312 + $0x38] sm:$0xff] %v636
        %645 = vmatpush.msra.mxu0 %v405
        %646 = vmatpush.msra.mxu0 %v404
        %647 = vmatpush.msra.mxu0 %v403
        %648 = vmatpush.msra.mxu0 %v402
        %649 = vmatpush.msra.mxu0 %v401
        %650 = vmatpush.msra.mxu0 %v400
        %651 = vmatpush.msra.mxu0 %v399
        %652 = vmatpush.msra.mxu0 %v398
        %653 = vmatpush.msra.mxu0 %v397
        %654 = vmatpush.msra.mxu0 %v396
        %655 = vmatpush.msra.mxu0 %v395
        %656 = vmatpush.msra.mxu0 %v394
        %657 = vmatpush.msra.mxu0 %v393
        %658 = vmatpush.msra.mxu0 %v392
        %659 = vmatpush.msra.mxu0 %v391
        %660 = vmatpush.msra.mxu0 %v390
        %661 = vmatmul.f32.gmra.mxu0 %v629
        %v662 = vpop.f32.mrf.mxu0
        %v663 = vadd.f32 0.0, %v662
        %664 = vmatmul.f32.gmra.mxu0 %v630
        %v665 = vpop.f32.mrf.mxu0
        %v666 = vadd.f32 0.0, %v665
        %667 = vdwg.mxu0
        %668 = vmatpush.msra.mxu0 %v421
        %669 = vmatpush.msra.mxu0 %v420
        %670 = vmatpush.msra.mxu0 %v419
        %671 = vmatpush.msra.mxu0 %v418
        %672 = vmatpush.msra.mxu0 %v417
        %673 = vmatpush.msra.mxu0 %v416
        %674 = vmatpush.msra.mxu0 %v415
        %675 = vmatpush.msra.mxu0 %v414
        %676 = vmatpush.msra.mxu0 %v413
        %677 = vmatpush.msra.mxu0 %v412
        %678 = vmatpush.msra.mxu0 %v411
        %679 = vmatpush.msra.mxu0 %v410
        %680 = vmatpush.msra.mxu0 %v409
        %681 = vmatpush.msra.mxu0 %v408
        %682 = vmatpush.msra.mxu0 %v407
        %683 = vmatpush.msra.mxu0 %v406
        %684 = vmatmul.f32.gmra.mxu0 %v631
        %v685 = vpop.f32.mrf.mxu0
        %v686 = vadd.f32 0.0, %v685
        %687 = vmatmul.f32.gmra.mxu0 %v632
        %v688 = vpop.f32.mrf.mxu0
        %v689 = vadd.f32 0.0, %v688
        %690 = vdwg.mxu0
        %691 = vmatpush.msra.mxu0 %v437
        %692 = vmatpush.msra.mxu0 %v436
        %693 = vmatpush.msra.mxu0 %v435
        %694 = vmatpush.msra.mxu0 %v434
        %695 = vmatpush.msra.mxu0 %v433
        %696 = vmatpush.msra.mxu0 %v432
        %697 = vmatpush.msra.mxu0 %v431
        %698 = vmatpush.msra.mxu0 %v430
        %699 = vmatpush.msra.mxu0 %v429
        %700 = vmatpush.msra.mxu0 %v428
        %701 = vmatpush.msra.mxu0 %v427
        %702 = vmatpush.msra.mxu0 %v426
        %703 = vmatpush.msra.mxu0 %v425
        %704 = vmatpush.msra.mxu0 %v424
        %705 = vmatpush.msra.mxu0 %v423
        %706 = vmatpush.msra.mxu0 %v422
        %707 = vmatmul.f32.gmra.mxu0 %v633
        %v708 = vpop.f32.mrf.mxu0
        %v709 = vadd.f32 0.0, %v708
        %710 = vmatmul.f32.gmra.mxu0 %v634
        %v711 = vpop.f32.mrf.mxu0
        %v712 = vadd.f32 0.0, %v711
        %713 = vdwg.mxu0
        %714 = vmatpush.msra.mxu0 %v453
        %715 = vmatpush.msra.mxu0 %v452
        %716 = vmatpush.msra.mxu0 %v451
        %717 = vmatpush.msra.mxu0 %v450
        %718 = vmatpush.msra.mxu0 %v449
        %719 = vmatpush.msra.mxu0 %v448
        %720 = vmatpush.msra.mxu0 %v447
        %721 = vmatpush.msra.mxu0 %v446
        %722 = vmatpush.msra.mxu0 %v445
        %723 = vmatpush.msra.mxu0 %v444
        %724 = vmatpush.msra.mxu0 %v443
        %725 = vmatpush.msra.mxu0 %v442
        %726 = vmatpush.msra.mxu0 %v441
        %727 = vmatpush.msra.mxu0 %v440
        %728 = vmatpush.msra.mxu0 %v439
        %729 = vmatpush.msra.mxu0 %v438
        %730 = vmatmul.f32.gmra.mxu0 %v635
        %v731 = vpop.f32.mrf.mxu0
        %v732 = vadd.f32 0.0, %v731
        %733 = vmatmul.f32.gmra.mxu0 %v636
        %v734 = vpop.f32.mrf.mxu0
        %v735 = vadd.f32 0.0, %v734
        %736 = vdwg.mxu0
        %737 = vst [vmem:[%s305] sm:$0xff] %v663
        %738 = vst [vmem:[%s305 + $0x8] sm:$0xff] %v666
        %739 = vst [vmem:[%s305 + $0x10] sm:$0xff] %v686
        %740 = vst [vmem:[%s305 + $0x18] sm:$0xff] %v689
        %741 = vst [vmem:[%s305 + $0x20] sm:$0xff] %v709
        %742 = vst [vmem:[%s305 + $0x28] sm:$0xff] %v712
        %743 = vst [vmem:[%s305 + $0x30] sm:$0xff] %v732
        %744 = vst [vmem:[%s305 + $0x38] sm:$0xff] %v735
        %s745 = sand.u32 %s114, 1
        %s746 = scalar_lea.sflag [#allocation4], %s745
        %s747 = sand.u32 %s114, 1
        %s748 = smul.addr %s747, 64
        %s749 = scalar_lea.vmem [#allocation8], %s748
        %s750 = sand.u32 %s140, 1
        %s751 = scalar_lea.sflag [#allocation10], %s750
        %s752 = sand.u32 %s140, 1
        %s753 = smul.addr %s752, 64
        %s754 = scalar_lea.vmem [#allocation9], %s753
        // Predicated region
        $region45: #{tpu_custom_call.1} parent=31 // pred_check
          %p755 = pneg %p124
        $region46: #{tpu_custom_call.1} parent=31 // pred_check_branch
          %757 = sbr.rel (%p755) target = $region48
        $region47: #{tpu_custom_call.1} parent=31 // pred_region
          %s758 = smul.u32 4, %s28
          %760 = vsyncadd %s746, 0
          %s761 = smul.addr %s758, 2
          %s762 = smul.addr %s761, 8
          %s763 = scalar_lea.hbm %s3, %s762
          %s764 = sshll.u32 %s749, 4
          %s765 = int_to_ptr.vmem [resolvable:$true] %s764
          %s766 = sshll.u32 %s763, 4
          %s767 = int_to_ptr.hbm [resolvable:$true] %s766
          %772 = dma.vmem_to_hbm [thread:$0]  %s765, 1024, %s767, %s746, 128, 128, 8
        $region48: #{tpu_custom_call.1} parent=31 // pred_fallthru
          _
        // Predicated region
        $region49: #{tpu_custom_call.1} parent=31 // pred_check
          %p773 = pneg %p150
        $region50: #{tpu_custom_call.1} parent=31 // pred_check_branch
          %775 = sbr.rel (%p773) target = $region52
        $region51: #{tpu_custom_call.1} parent=31 // pred_region
          %s776 = smul.u32 4, %s28
          %778 = vsyncadd %s751, 0
          %s779 = smul.addr %s776, 2
          %s780 = smul.addr %s779, 8
          %s781 = scalar_lea.hbm %s4, %s780
          %s782 = sshll.u32 %s754, 4
          %s783 = int_to_ptr.vmem [resolvable:$true] %s782
          %s784 = sshll.u32 %s781, 4
          %s785 = int_to_ptr.hbm [resolvable:$true] %s784
          %790 = dma.vmem_to_hbm [thread:$0]  %s783, 1024, %s785, %s751, 128, 128, 8
        $region52: #{tpu_custom_call.1} parent=31 // pred_fallthru
          _
      $region32: #{tpu_custom_call.1} parent=5 // pred_fallthru
        _
      %p791 = scmp.le.s32.totalorder 2, %s23
      // Predicated region
      $region53: #{tpu_custom_call.1} parent=5 // pred_check
        %p792 = pneg %p791
      $region54: #{tpu_custom_call.1} parent=5 // pred_check_branch
        %794 = sbr.rel (%p792) target = $region56
      $region55: #{tpu_custom_call.1} parent=5 // pred_region
        %s795 = ssub.s32 %s23, 2
        // Predicated region
        $region57: #{tpu_custom_call.1} parent=55 // pred_check
          %p796 = pneg %p130
        $region58: #{tpu_custom_call.1} parent=55 // pred_check_branch
          %798 = sbr.rel (%p796) target = $region60
        $region59: #{tpu_custom_call.1} parent=55 // pred_region
          %s799 = sand.u32 %s115, 1
          %s800 = scalar_lea.sflag [#allocation4], %s799
          %s801 = sand.u32 %s115, 1
          %s802 = smul.addr %s801, 64
          %s803 = scalar_lea.vmem [#allocation8], %s802
          %805 = dma.done %s800, 1024
        $region60: #{tpu_custom_call.1} parent=55 // pred_fallthru
          _
        // Predicated region
        $region61: #{tpu_custom_call.1} parent=55 // pred_check
          %p806 = pneg %p156
        $region62: #{tpu_custom_call.1} parent=55 // pred_check_branch
          %808 = sbr.rel (%p806) target = $region64
        $region63: #{tpu_custom_call.1} parent=55 // pred_region
          %s809 = sand.u32 %s141, 1
          %s810 = scalar_lea.sflag [#allocation10], %s809
          %s811 = sand.u32 %s141, 1
          %s812 = smul.addr %s811, 64
          %s813 = scalar_lea.vmem [#allocation9], %s812
          %815 = dma.done %s810, 1024
        $region64: #{tpu_custom_call.1} parent=55 // pred_fallthru
          _
      $region56: #{tpu_custom_call.1} parent=5 // pred_fallthru
        _
    $region6: #{tpu_custom_call.1} parent=1 // loop_footer
      %s27 = sadd.s32 1, %s23
    $region7: #{tpu_custom_call.1} parent=1 // loop_footer_branch
      %22 = sbr.rel target = $region3
    $region8: #{tpu_custom_call.1} parent=1 // loop_exit
      _
    %816 = vsyncpa [#allocation3], 1
    %s817 = scalar_lea.sflag [#allocation3], 1
    %818 = vsyncpa %s817, 1
    %819 = vsyncpa [#allocation6], 1
    %s820 = scalar_lea.sflag [#allocation6], 1
    %821 = vsyncpa %s820, 1
    %822 = vsyncpa [#allocation4], 1
    %s823 = scalar_lea.sflag [#allocation4], 1
    %824 = vsyncpa %s823, 1
    %825 = vsyncpa [#allocation10], 1
    %s826 = scalar_lea.sflag [#allocation10], 1
    %827 = vsyncpa %s826, 1

</llo_original>
